<compile_context>
chip_gen: v6e
topology: v6e:2x2x1
jax: 0.10.0
libtpu: 0.0.40
codegen_flags: <defaults>
</compile_context>

<pallas_src>
import numpy as np
import jax
import jax.numpy as jnp
from jax.experimental import pallas as pl
from jax.experimental.pallas import tpu as pltpu

EPS = 1e-5  # InstanceNorm3d default eps


def _downblock_kernel(x_ref, w_ref, g_ref, b_ref, o_ref):
    # x_ref: (1, K_pad, P)  bf16  im2col patches, spatial P on lanes (permuted)
    # w_ref: (Cout, K_pad)  bf16  conv weight, zero-padded along K
    # g_ref, b_ref: (Cout, 1) f32 InstanceNorm affine params
    # o_ref: (1, Cout, P_out) f32 pooled output, lane dense
    x = x_ref[0]

    # Conv3d as a single lane-dense MXU matmul (bf16 in, f32 accumulate).
    # Conv bias is omitted: InstanceNorm removes any per-channel constant exactly.
    conv = jnp.dot(w_ref[...], x, preferred_element_type=jnp.float32)  # (Cout, P)

    # InstanceNorm3d stats over all D*H*W positions (lane/XLU reductions).
    inv_p = 1.0 / conv.shape[-1]
    mean = jnp.sum(conv, axis=1, keepdims=True) * inv_p                # (Cout, 1)
    mean_sq = jnp.sum(conv * conv, axis=1, keepdims=True) * inv_p      # (Cout, 1)
    var = jnp.maximum(mean_sq - mean * mean, 0.0)                      # biased var

    # Fold gamma, rsqrt and the AvgPool 0.25 (ReLU commutes with positive scale)
    # into one per-channel scale/shift -> normalize+ReLU is mul + add + max.
    scale = (0.25 * g_ref[...]) * jax.lax.rsqrt(var + EPS)             # (Cout, 1)
    shift = 0.25 * b_ref[...] - mean * scale                           # (Cout, 1)
    y = jnp.maximum(conv * scale + shift, 0.0)                         # (Cout, P)

    # AvgPool3d((1,2,2)): P is permuted as (h%2, w%2, d, h//2, w//2), so the four
    # pool taps are four contiguous 128-aligned lane blocks of length P_out.
    # The 1/4 factor was already folded into `scale`/`shift` above.
    p_out = o_ref.shape[-1]
    pooled = (y[:, 0 * p_out:1 * p_out] + y[:, 1 * p_out:2 * p_out] +
              y[:, 2 * p_out:3 * p_out] + y[:, 3 * p_out:4 * p_out])
    o_ref[0] = pooled.astype(o_ref.dtype)


def _im2col_3d_pool_permuted(x_cl):
    # x_cl: (N, D, H, W, C) channels-last (bf16) -> (N, 27*C, P) with the spatial
    # axis permuted so the 2x2 AvgPool taps become contiguous lane blocks:
    #   P index order = (h % 2, w % 2, d, h // 2, w // 2)
    # TODO(synk): replace this host-side im2col (27x HBM read amplification) with
    # in-kernel tap accumulation over a single DMA'd padded input block.
    N, D, H, W, C = x_cl.shape
    H2, W2 = H // 2, W // 2
    xp = jnp.pad(x_cl, ((0, 0), (1, 1), (1, 1), (1, 1), (0, 0)))
    cols = []
    for kd in range(3):
        for kh in range(3):
            for kw in range(3):
                cols.append(xp[:, kd:kd + D, kh:kh + H, kw:kw + W, :])
    pat = jnp.stack(cols, axis=1)                        # (N, 27, D, H, W, C)
    pat = pat.reshape(N, 27, D, H2, 2, W2, 2, C)
    pat = jnp.transpose(pat, (0, 4, 6, 2, 3, 5, 1, 7))   # (N, 2, 2, D, H2, W2, 27, C)
    pat = pat.reshape(N, 4 * D * H2 * W2, 27 * C)        # (N, P, K)   (permuted P)
    return jnp.transpose(pat, (0, 2, 1))                 # (N, K, P)


@jax.jit
def downblock3d_pallas(x, weight, bias, gamma, beta):
    # x: (N, Cin, D, H, W); weight: (Cout, Cin, 3, 3, 3); bias/gamma/beta: (Cout,)
    N, Cin, D, H, W = x.shape
    Cout = weight.shape[0]
    assert H % 2 == 0 and W % 2 == 0, "AvgPool3d((1,2,2)) path assumes even H, W"
    H2, W2 = H // 2, W // 2
    P, P_out, K = D * H * W, D * H2 * W2, 27 * Cin
    K_pad = ((K + 127) // 128) * 128                     # unmasked loads, clean MXU K

    # bf16 feed for the MXU (f32 accumulation inside the kernel); cast before the
    # im2col so the expanded patch tensor is half the HBM bytes.
    x_cl = jnp.transpose(x, (0, 2, 3, 4, 1)).astype(jnp.bfloat16)   # (N, D, H, W, Cin)
    patches = _im2col_3d_pool_permuted(x_cl)                        # (N, K, P)
    patches = jnp.pad(patches, ((0, 0), (0, K_pad - K), (0, 0)))

    # torch weight (Cout, Cin, kd, kh, kw) -> (Cout, kd, kh, kw, Cin) -> (Cout, K)
    wmat = jnp.transpose(weight, (0, 2, 3, 4, 1)).reshape(Cout, K)
    wmat = jnp.pad(wmat, ((0, 0), (0, K_pad - K))).astype(jnp.bfloat16)
    del bias  # exactly cancelled by the InstanceNorm mean subtraction

    g = gamma.reshape(Cout, 1).astype(jnp.float32)
    b = beta.reshape(Cout, 1).astype(jnp.float32)

    # TODO(synk): for large D*H*W (v7x: 64 MiB VMEM) add a P-tile grid axis with a
    # two-pass (sum / sumsq VMEM scratch) InstanceNorm instead of keeping the full
    # (K_pad, P) and (Cout, P) blocks resident per grid step.
    out = pl.pallas_call(
        _downblock_kernel,
        out_shape=jax.ShapeDtypeStruct((N, Cout, P_out), jnp.float32),
        grid_spec=pltpu.PrefetchScalarGridSpec(
            num_scalar_prefetch=0,
            grid=(N,),
            in_specs=[
                pl.BlockSpec((1, K_pad, P), lambda n: (n, 0, 0)),  # patches
                pl.BlockSpec((Cout, K_pad), lambda n: (0, 0)),     # conv weight
                pl.BlockSpec((Cout, 1), lambda n: (0, 0)),         # IN gamma
                pl.BlockSpec((Cout, 1), lambda n: (0, 0)),         # IN beta
            ],
            out_specs=pl.BlockSpec((1, Cout, P_out), lambda n: (n, 0, 0)),
        ),
        compiler_params=pltpu.CompilerParams(
            dimension_semantics=("parallel",)),
    )(patches, wmat, g, b)

    # (N, Cout, P_out) with P_out flattened as (d, h2, w2) -> NCDHW
    return out.reshape(N, Cout, D, H2, W2)


def _reference(x, weight, bias, gamma, beta):
    # Pure-JAX reference mirroring the PyTorch forward (NCDHW, f32 throughout).
    out = jax.lax.conv_general_dilated(
        x, weight, window_strides=(1, 1, 1),
        padding=((1, 1), (1, 1), (1, 1)),
        dimension_numbers=("NCDHW", "OIDHW", "NCDHW"))
    out = out + bias[None, :, None, None, None]
    mean = out.mean(axis=(2, 3, 4), keepdims=True)
    var = ((out - mean) ** 2).mean(axis=(2, 3, 4), keepdims=True)
    out = (out - mean) * jax.lax.rsqrt(var + EPS)
    out = out * gamma[None, :, None, None, None] + beta[None, :, None, None, None]
    out = jnp.maximum(out, 0.0)
    N, C, D, H, W = out.shape
    out = out.reshape(N, C, D, H // 2, 2, W // 2, 2).mean(axis=(4, 6))
    return out


if __name__ == "__main__":
    key = jax.random.PRNGKey(0)
    kx, kw, kb, kg, kbe = jax.random.split(key, 5)

    N, Cin, Cout, D, H, W = 2, 4, 8, 4, 16, 16
    x = jax.random.normal(kx, (N, Cin, D, H, W), jnp.float32)
    # Deterministic synthetic parameters (shapes from nn.Conv3d / InstanceNorm3d).
    weight = 0.1 * jax.random.normal(kw, (Cout, Cin, 3, 3, 3), jnp.float32)
    bias = 0.1 * jax.random.normal(kb, (Cout,), jnp.float32)
    gamma = 1.0 + 0.1 * jax.random.normal(kg, (Cout,), jnp.float32)
    beta = 0.1 * jax.random.normal(kbe, (Cout,), jnp.float32)

    out = downblock3d_pallas(x, weight, bias, gamma, beta)
    out = jax.block_until_ready(out)

    ref = _reference(x, weight, bias, gamma, beta)
    assert out.shape == ref.shape == (N, Cout, D, H // 2, W // 2)
    # bf16 matmul inputs with f32 accumulation -> looser tolerance than pure f32.
    np.testing.assert_allclose(np.asarray(out), np.asarray(ref),
                               rtol=2e-2, atol=2e-2)
    print("KERNEL_OK")
</pallas_src>

<mosaic_0001>
module attributes {stable_mosaic.version = 11 : i64} {
  func.func @_downblock_kernel(%arg0: i32, %arg1: memref<1x128x1024xbf16, #tpu.memory_space<vmem>>, %arg2: memref<8x128xbf16, #tpu.memory_space<vmem>>, %arg3: memref<8x1xf32, #tpu.memory_space<vmem>>, %arg4: memref<8x1xf32, #tpu.memory_space<vmem>>, %arg5: memref<1x8x256xf32, #tpu.memory_space<vmem>>) attributes {dimension_semantics = [#tpu.dimension_semantics<parallel>], iteration_bounds = array<i64: 2>, scalar_prefetch = 0 : i64, scratch_operands = 0 : i64, tpu.core_type = #tpu.core_type<tc>, window_params = [{transform_indices = @transform_0, window_bounds = array<i64: 1, 128, 1024>}, {pipeline_mode = #tpu.pipeline_mode<synchronous>, transform_indices = @transform_1, window_bounds = array<i64: 8, 128>}, {pipeline_mode = #tpu.pipeline_mode<synchronous>, transform_indices = @transform_2, window_bounds = array<i64: 8, 1>}, {pipeline_mode = #tpu.pipeline_mode<synchronous>, transform_indices = @transform_3, window_bounds = array<i64: 8, 1>}, {transform_indices = @transform_4, window_bounds = array<i64: 1, 8, 256>}]} {
    %c0 = arith.constant 0 : index
    %c0_0 = arith.constant 0 : index
    %c0_1 = arith.constant 0 : index
    %0 = vector.load %arg1[%c0, %c0_0, %c0_1] : memref<1x128x1024xbf16, #tpu.memory_space<vmem>>, vector<1x128x1024xbf16>
    %1 = vector.shape_cast %0 : vector<1x128x1024xbf16> to vector<128x1024xbf16>
    %c0_2 = arith.constant 0 : index
    %c0_3 = arith.constant 0 : index
    %2 = vector.load %arg2[%c0_2, %c0_3] : memref<8x128xbf16, #tpu.memory_space<vmem>>, vector<8x128xbf16>
    %cst = arith.constant dense<0.000000e+00> : vector<8x1024xf32>
    %3 = tpu.matmul %2, %1, %cst {dimension_numbers = #tpu.dot_dimension_numbers<[1], [0], [0], [1], [0, 0, 1, 1], [], []>} : vector<8x128xbf16>, vector<128x1024xbf16>, vector<8x1024xf32> -> vector<8x1024xf32>
    %cst_4 = arith.constant dense<0.000000e+00> : vector<8xf32>
    %4 = vector.multi_reduction <add>, %3, %cst_4 [1] : vector<8x1024xf32> to vector<8xf32>
    %5 = vector.shape_cast %4 : vector<8xf32> to vector<8x1xf32>
    %cst_5 = arith.constant 9.765625E-4 : f32
    %6 = vector.broadcast %cst_5 : f32 to vector<8x1xf32>
    %7 = arith.mulf %5, %6 : vector<8x1xf32>
    %8 = arith.mulf %3, %3 : vector<8x1024xf32>
    %cst_6 = arith.constant dense<0.000000e+00> : vector<8xf32>
    %9 = vector.multi_reduction <add>, %8, %cst_6 [1] : vector<8x1024xf32> to vector<8xf32>
    %10 = vector.shape_cast %9 : vector<8xf32> to vector<8x1xf32>
    %cst_7 = arith.constant 9.765625E-4 : f32
    %11 = vector.broadcast %cst_7 : f32 to vector<8x1xf32>
    %12 = arith.mulf %10, %11 : vector<8x1xf32>
    %13 = arith.mulf %7, %7 : vector<8x1xf32>
    %14 = arith.subf %12, %13 : vector<8x1xf32>
    %cst_8 = arith.constant 0.000000e+00 : f32
    %15 = vector.broadcast %cst_8 : f32 to vector<8x1xf32>
    %16 = arith.maximumf %14, %15 : vector<8x1xf32>
    %c0_9 = arith.constant 0 : index
    %c0_10 = arith.constant 0 : index
    %17 = vector.load %arg3[%c0_9, %c0_10] : memref<8x1xf32, #tpu.memory_space<vmem>>, vector<8x1xf32>
    %cst_11 = arith.constant 2.500000e-01 : f32
    %18 = vector.broadcast %cst_11 : f32 to vector<8x1xf32>
    %19 = arith.mulf %18, %17 : vector<8x1xf32>
    %cst_12 = arith.constant 9.99999974E-6 : f32
    %20 = vector.broadcast %cst_12 : f32 to vector<8x1xf32>
    %21 = arith.addf %16, %20 : vector<8x1xf32>
    %22 = math.rsqrt %21 : vector<8x1xf32>
    %23 = arith.mulf %19, %22 : vector<8x1xf32>
    %c0_13 = arith.constant 0 : index
    %c0_14 = arith.constant 0 : index
    %24 = vector.load %arg4[%c0_13, %c0_14] : memref<8x1xf32, #tpu.memory_space<vmem>>, vector<8x1xf32>
    %cst_15 = arith.constant 2.500000e-01 : f32
    %25 = vector.broadcast %cst_15 : f32 to vector<8x1xf32>
    %26 = arith.mulf %25, %24 : vector<8x1xf32>
    %27 = arith.mulf %7, %23 : vector<8x1xf32>
    %28 = arith.subf %26, %27 : vector<8x1xf32>
    %29 = vector.broadcast %23 : vector<8x1xf32> to vector<8x1024xf32>
    %30 = arith.mulf %3, %29 : vector<8x1024xf32>
    %31 = vector.broadcast %28 : vector<8x1xf32> to vector<8x1024xf32>
    %32 = arith.addf %30, %31 : vector<8x1024xf32>
    %cst_16 = arith.constant 0.000000e+00 : f32
    %33 = vector.broadcast %cst_16 : f32 to vector<8x1024xf32>
    %34 = arith.maximumf %32, %33 : vector<8x1024xf32>
    %35 = vector.extract_strided_slice %34 {offsets = [0, 0], sizes = [8, 256], strides = [1, 1]} : vector<8x1024xf32> to vector<8x256xf32>
    %36 = vector.extract_strided_slice %34 {offsets = [0, 256], sizes = [8, 256], strides = [1, 1]} : vector<8x1024xf32> to vector<8x256xf32>
    %37 = arith.addf %35, %36 : vector<8x256xf32>
    %38 = vector.extract_strided_slice %34 {offsets = [0, 512], sizes = [8, 256], strides = [1, 1]} : vector<8x1024xf32> to vector<8x256xf32>
    %39 = arith.addf %37, %38 : vector<8x256xf32>
    %40 = vector.extract_strided_slice %34 {offsets = [0, 768], sizes = [8, 256], strides = [1, 1]} : vector<8x1024xf32> to vector<8x256xf32>
    %41 = arith.addf %39, %40 : vector<8x256xf32>
    %c0_17 = arith.constant 0 : index
    %c0_18 = arith.constant 0 : index
    %c0_19 = arith.constant 0 : index
    %42 = vector.load %arg5[%c0_17, %c0_18, %c0_19] : memref<1x8x256xf32, #tpu.memory_space<vmem>>, vector<1x8x256xf32>
    %43 = vector.shape_cast %42 : vector<1x8x256xf32> to vector<8x256xf32>
    %44 = vector.shape_cast %41 : vector<8x256xf32> to vector<1x8x256xf32>
    tpu.vector_store %arg5[%c0_17, %c0_18, %c0_19], %44 {strides = array<i32>} : memref<1x8x256xf32, #tpu.memory_space<vmem>>, vector<1x8x256xf32>,
    return
  }
  func.func @transform_0(%arg0: i32) -> (i32, i32, i32) {
    %c0_i32 = arith.constant 0 : i32
    %c0_i32_0 = arith.constant 0 : i32
    %c0_i32_1 = arith.constant 0 : i32
    return %arg0, %c0_i32, %c0_i32_0 : i32, i32, i32
  }
  func.func @transform_1(%arg0: i32) -> (i32, i32) {
    %c0_i32 = arith.constant 0 : i32
    %c0_i32_0 = arith.constant 0 : i32
    %c0_i32_1 = arith.constant 0 : i32
    return %c0_i32, %c0_i32_0 : i32, i32
  }
  func.func @transform_2(%arg0: i32) -> (i32, i32) {
    %c0_i32 = arith.constant 0 : i32
    %c0_i32_0 = arith.constant 0 : i32
    %c0_i32_1 = arith.constant 0 : i32
    return %c0_i32, %c0_i32_0 : i32, i32
  }
  func.func @transform_3(%arg0: i32) -> (i32, i32) {
    %c0_i32 = arith.constant 0 : i32
    %c0_i32_0 = arith.constant 0 : i32
    %c0_i32_1 = arith.constant 0 : i32
    return %c0_i32, %c0_i32_0 : i32, i32
  }
  func.func @transform_4(%arg0: i32) -> (i32, i32, i32) {
    %c0_i32 = arith.constant 0 : i32
    %c0_i32_0 = arith.constant 0 : i32
    %c0_i32_1 = arith.constant 0 : i32
    return %arg0, %c0_i32, %c0_i32_0 : i32, i32, i32
  }
}

</mosaic_0001>

<llo_original>
// kernel: downblock3d_pallas.1
$region0: #{downblock3d_pallas.1}
  #allocation0 [shape = 'u32[]', space=smem, size = 0x4, offset = 0x4, fixed_abs, tag = 'smem constant byte address 0x4 - core index']
  #allocation1 [shape = 'u32[144,128]{1,0:T(1,128)}', space=vmem, size = 0x12000, scoped, tag = 'internal scratch']
  %s0 = inlined_call_operand.vmem [shape: bf16[2,128,1024], index: 0, kind: input, shape index: {}]
  %s1 = inlined_call_operand.vmem [shape: bf16[8,128], index: 1, kind: input, shape index: {}]
  %s2 = inlined_call_operand.vmem [shape: f32[8,1], index: 2, kind: input, shape index: {}]
  %s3 = inlined_call_operand.vmem [shape: f32[8,1], index: 3, kind: input, shape index: {}]
  %s4 = inlined_call_operand.vmem [shape: f32[2,8,256], index: 4, kind: output, shape index: {}]
  %s5 = sld [smem:[#allocation0]]
  $region49: #{downblock3d_pallas.1} parent=0
    _
  %s7 = ssub.s32 1, %s5
  %s8 = scalar_select 0, %s7, %s5
  loop: start=0, step=1, limit=4
  $region2: #{downblock3d_pallas.1} parent=0 // loop_pre_header
    _
  $region3: #{downblock3d_pallas.1} parent=0 // loop_header
    %s10 = sphi 0, %s14
    %p11 = scmp.ge.s32.totalorder %s10, 4
    %s20 = sphi 0, %s22
    %s23 = sphi 0, %s20
    %s24 = sphi 0, %s23
    %s40 = sphi 0, %s24
    %s44 = sphi 0, %s44
    %s46 = sphi 0, %s44
    %s47 = sphi 0, %s46
    %s61 = sphi 0, %s47
    %s65 = sphi 0, %s65
    %s67 = sphi 0, %s65
    %s68 = sphi 0, %s67
    %s82 = sphi 0, %s68
    %s86 = sphi 0, %s86
    %s88 = sphi 0, %s86
    %s89 = sphi 0, %s88
    %s103 = sphi 0, %s89
    %s109 = sphi 0, %s111
    %s112 = sphi 0, %s109
    %s113 = sphi 0, %s112
    %s129 = sphi 0, %s113
  $region4: #{downblock3d_pallas.1} parent=0 // loop_header_branch
    %13 = sbr.rel (%p11) target = $region8
  $region5: #{downblock3d_pallas.1} parent=0 // loop_body
    %s15 = ssub.s32 %s10, 1
    %s16 = ssub.s32 %s10, 2
    %s17 = sadd.s32 %s10, 1
    %s18 = ssub.s32 %s10, %s17
    %p19 = scmp.eq.s32.totalorder %s18, 0
    %s21 = sadd.s32 %s20, 1
    %s22 = scalar_select %p19, %s20, %s21
    %p25 = pneg %p19
    %p26 = scmp.eq.s32.totalorder %s10, 1
    %p27 = por %p25, %p26
    %p28 = scmp.ne.s32.totalorder %s20, %s23
    %p29 = scmp.eq.s32.totalorder %s10, 0
    %p30 = por %p28, %p29
    %p31 = scmp.ne.s32.totalorder %s20, %s23
    %p32 = scmp.eq.s32.totalorder %s15, 1
    %p33 = por %p31, %p32
    %p34 = scmp.ne.s32.totalorder %s23, %s24
    %p35 = scmp.eq.s32.totalorder %s15, 0
    %p36 = por %p34, %p35
    %p37 = scmp.ne.s32.totalorder %s23, %s24
    %p38 = scmp.eq.s32.totalorder %s16, 1
    %p39 = por %p37, %p38
    %p41 = scmp.ne.s32.totalorder %s24, %s40
    %p42 = scmp.eq.s32.totalorder %s16, 0
    %p43 = por %p41, %p42
    %s45 = sadd.s32 %s44, 1
    %p48 = scmp.eq.s32.totalorder %s10, 1
    %p49 = scmp.ne.s32.totalorder %s44, %s46
    %p50 = scmp.eq.s32.totalorder %s10, 0
    %p51 = por %p49, %p50
    %p52 = scmp.ne.s32.totalorder %s44, %s46
    %p53 = scmp.eq.s32.totalorder %s15, 1
    %p54 = por %p52, %p53
    %p55 = scmp.ne.s32.totalorder %s46, %s47
    %p56 = scmp.eq.s32.totalorder %s15, 0
    %p57 = por %p55, %p56
    %p58 = scmp.ne.s32.totalorder %s46, %s47
    %p59 = scmp.eq.s32.totalorder %s16, 1
    %p60 = por %p58, %p59
    %p62 = scmp.ne.s32.totalorder %s47, %s61
    %p63 = scmp.eq.s32.totalorder %s16, 0
    %p64 = por %p62, %p63
    %s66 = sadd.s32 %s65, 1
    %p69 = scmp.eq.s32.totalorder %s10, 1
    %p70 = scmp.ne.s32.totalorder %s65, %s67
    %p71 = scmp.eq.s32.totalorder %s10, 0
    %p72 = por %p70, %p71
    %p73 = scmp.ne.s32.totalorder %s65, %s67
    %p74 = scmp.eq.s32.totalorder %s15, 1
    %p75 = por %p73, %p74
    %p76 = scmp.ne.s32.totalorder %s67, %s68
    %p77 = scmp.eq.s32.totalorder %s15, 0
    %p78 = por %p76, %p77
    %p79 = scmp.ne.s32.totalorder %s67, %s68
    %p80 = scmp.eq.s32.totalorder %s16, 1
    %p81 = por %p79, %p80
    %p83 = scmp.ne.s32.totalorder %s68, %s82
    %p84 = scmp.eq.s32.totalorder %s16, 0
    %p85 = por %p83, %p84
    %s87 = sadd.s32 %s86, 1
    %p90 = scmp.eq.s32.totalorder %s10, 1
    %p91 = scmp.ne.s32.totalorder %s86, %s88
    %p92 = scmp.eq.s32.totalorder %s10, 0
    %p93 = por %p91, %p92
    %p94 = scmp.ne.s32.totalorder %s86, %s88
    %p95 = scmp.eq.s32.totalorder %s15, 1
    %p96 = por %p94, %p95
    %p97 = scmp.ne.s32.totalorder %s88, %s89
    %p98 = scmp.eq.s32.totalorder %s15, 0
    %p99 = por %p97, %p98
    %p100 = scmp.ne.s32.totalorder %s88, %s89
    %p101 = scmp.eq.s32.totalorder %s16, 1
    %p102 = por %p100, %p101
    %p104 = scmp.ne.s32.totalorder %s89, %s103
    %p105 = scmp.eq.s32.totalorder %s16, 0
    %p106 = por %p104, %p105
    %s107 = ssub.s32 %s10, %s17
    %p108 = scmp.eq.s32.totalorder %s107, 0
    %s110 = sadd.s32 %s109, 1
    %s111 = scalar_select %p108, %s109, %s110
    %p114 = pneg %p108
    %p115 = scmp.eq.s32.totalorder %s10, 1
    %p116 = por %p114, %p115
    %p117 = scmp.ne.s32.totalorder %s109, %s112
    %p118 = scmp.eq.s32.totalorder %s10, 0
    %p119 = por %p117, %p118
    %p120 = scmp.ne.s32.totalorder %s109, %s112
    %p121 = scmp.eq.s32.totalorder %s15, 1
    %p122 = por %p120, %p121
    %p123 = scmp.ne.s32.totalorder %s112, %s113
    %p124 = scmp.eq.s32.totalorder %s15, 0
    %p125 = por %p123, %p124
    %p126 = scmp.ne.s32.totalorder %s112, %s113
    %p127 = scmp.eq.s32.totalorder %s16, 1
    %p128 = por %p126, %p127
    %p130 = scmp.ne.s32.totalorder %s113, %s129
    %p131 = scmp.eq.s32.totalorder %s16, 0
    %p132 = por %p130, %p131
    %p133 = scmp.le.s32.totalorder 1, %s10
    %p134 = scmp.lt.s32.totalorder %s10, 3
    %p135 = pnand %p133, %p134
    %p136 = pneg %p135
    // Predicated region
    $region9: #{downblock3d_pallas.1} parent=5 // pred_check
      _
    $region10: #{downblock3d_pallas.1} parent=5 // pred_check_branch
      %138 = sbr.rel (%p135) target = $region12
    $region11: #{downblock3d_pallas.1} parent=5 // pred_region
      %s139 = ssub.s32 %s10, 1
      // Predicated region
      $region13: #{downblock3d_pallas.1} parent=11 // pred_check
        %p140 = pneg %p57
      $region14: #{downblock3d_pallas.1} parent=11 // pred_check_branch
        %142 = sbr.rel (%p140) target = $region16
      $region15: #{downblock3d_pallas.1} parent=11 // pred_region
        _
      $region16: #{downblock3d_pallas.1} parent=11 // pred_fallthru
        _
      // Predicated region
      $region17: #{downblock3d_pallas.1} parent=11 // pred_check
        %p143 = pneg %p78
      $region18: #{downblock3d_pallas.1} parent=11 // pred_check_branch
        %145 = sbr.rel (%p143) target = $region20
      $region19: #{downblock3d_pallas.1} parent=11 // pred_region
        _
      $region20: #{downblock3d_pallas.1} parent=11 // pred_fallthru
        _
      // Predicated region
      $region21: #{downblock3d_pallas.1} parent=11 // pred_check
        %p146 = pneg %p99
      $region22: #{downblock3d_pallas.1} parent=11 // pred_check_branch
        %148 = sbr.rel (%p146) target = $region24
      $region23: #{downblock3d_pallas.1} parent=11 // pred_region
        _
      $region24: #{downblock3d_pallas.1} parent=11 // pred_fallthru
        _
    $region12: #{downblock3d_pallas.1} parent=5 // pred_fallthru
      _
    %p149 = scmp.lt.s32.totalorder %s10, 2
    // Predicated region
    $region25: #{downblock3d_pallas.1} parent=5 // pred_check
      %p150 = pneg %p149
    $region26: #{downblock3d_pallas.1} parent=5 // pred_check_branch
      %152 = sbr.rel (%p150) target = $region28
    $region27: #{downblock3d_pallas.1} parent=5 // pred_region
      // Predicated region
      $region29: #{downblock3d_pallas.1} parent=27 // pred_check
        %p153 = pneg %p30
      $region30: #{downblock3d_pallas.1} parent=27 // pred_check_branch
        %155 = sbr.rel (%p153) target = $region32
      $region31: #{downblock3d_pallas.1} parent=27 // pred_region
        %p156 = scmp.lt.s32.totalorder %s10, 1
        %s157 = scalar_select %p156, %s10, 1
        %s158 = smul.addr %s157, 128
        %s159 = smul.addr %s158, 4
        %s160 = scalar_lea.vmem %s0, %s159
      $region32: #{downblock3d_pallas.1} parent=27 // pred_fallthru
        _
    $region28: #{downblock3d_pallas.1} parent=5 // pred_fallthru
      _
    %p161 = scmp.le.s32.totalorder 1, %s10
    %p162 = scmp.lt.s32.totalorder %s10, 3
    %p163 = pnand %p161, %p162
    %p164 = pneg %p163
    // Predicated region
    $region33: #{downblock3d_pallas.1} parent=5 // pred_check
      _
    $region34: #{downblock3d_pallas.1} parent=5 // pred_check_branch
      %166 = sbr.rel (%p163) target = $region36
    $region35: #{downblock3d_pallas.1} parent=5 // pred_region
      %s167 = ssub.s32 %s10, 1
      %p168 = scmp.lt.s32.totalorder %s15, 1
      %s169 = scalar_select %p168, %s15, 1
      %s170 = smul.addr %s169, 128
      %s171 = smul.addr %s170, 4
      %s172 = scalar_lea.vmem %s0, %s171
      %p173 = pneg %p36
      %p174 = pneg %p33
      %p175 = pneg %p57
      %p176 = pneg %p54
      %p177 = pneg %p78
      %p178 = pneg %p75
      %p179 = pneg %p99
      %p180 = pneg %p96
      %p181 = pneg %p125
      %p182 = pneg %p122
      %p183 = scmp.lt.s32.totalorder %s15, 1
      %s184 = scalar_select %p183, %s15, 1
      %s185 = smul.addr %s184, 2
      %s186 = smul.addr %s185, 8
      %s187 = scalar_lea.vmem %s4, %s186
      %p188 = scmp.lt.s32.totalorder %s15, 1
      %s189 = scalar_select %p188, %s15, 1
      %s190 = smul.addr %s189, 128
      %s191 = smul.addr %s190, 4
      %s192 = scalar_lea.vmem %s0, %s191
      %p193 = scmp.lt.s32.totalorder %s15, 1
      %s194 = scalar_select %p193, %s15, 1
      %s195 = smul.addr %s194, 2
      %s196 = smul.addr %s195, 8
      %s197 = scalar_lea.vmem %s4, %s196
      %v199 = vld [vmem:[%s192] sm:$0xff]
      %v200 = vld [vmem:[%s192 + $0x8] sm:$0xff]
      %v201 = vld [vmem:[%s192 + $0x10] sm:$0xff]
      %v202 = vld [vmem:[%s192 + $0x18] sm:$0xff]
      %v203 = vld [vmem:[%s192 + $0x20] sm:$0xff]
      %v204 = vld [vmem:[%s192 + $0x28] sm:$0xff]
      %v205 = vld [vmem:[%s192 + $0x30] sm:$0xff]
      %v206 = vld [vmem:[%s192 + $0x38] sm:$0xff]
      %v207 = vld [vmem:[%s192 + $0x40] sm:$0xff]
      %v208 = vld [vmem:[%s192 + $0x48] sm:$0xff]
      %v209 = vld [vmem:[%s192 + $0x50] sm:$0xff]
      %v210 = vld [vmem:[%s192 + $0x58] sm:$0xff]
      %v211 = vld [vmem:[%s192 + $0x60] sm:$0xff]
      %v212 = vld [vmem:[%s192 + $0x68] sm:$0xff]
      %v213 = vld [vmem:[%s192 + $0x70] sm:$0xff]
      %v214 = vld [vmem:[%s192 + $0x78] sm:$0xff]
      %v215 = vld [vmem:[%s192 + $0x80] sm:$0xff]
      %v216 = vld [vmem:[%s192 + $0x88] sm:$0xff]
      %v217 = vld [vmem:[%s192 + $0x90] sm:$0xff]
      %v218 = vld [vmem:[%s192 + $0x98] sm:$0xff]
      %v219 = vld [vmem:[%s192 + $0xa0] sm:$0xff]
      %v220 = vld [vmem:[%s192 + $0xa8] sm:$0xff]
      %v221 = vld [vmem:[%s192 + $0xb0] sm:$0xff]
      %v222 = vld [vmem:[%s192 + $0xb8] sm:$0xff]
      %v223 = vld [vmem:[%s192 + $0xc0] sm:$0xff]
      %v224 = vld [vmem:[%s192 + $0xc8] sm:$0xff]
      %v225 = vld [vmem:[%s192 + $0xd0] sm:$0xff]
      %v226 = vld [vmem:[%s192 + $0xd8] sm:$0xff]
      %v227 = vld [vmem:[%s192 + $0xe0] sm:$0xff]
      %v228 = vld [vmem:[%s192 + $0xe8] sm:$0xff]
      %v229 = vld [vmem:[%s192 + $0xf0] sm:$0xff]
      %v230 = vld [vmem:[%s192 + $0xf8] sm:$0xff]
      %v231 = vld [vmem:[%s192 + $0x100] sm:$0xff]
      %v232 = vld [vmem:[%s192 + $0x108] sm:$0xff]
      %v233 = vld [vmem:[%s192 + $0x110] sm:$0xff]
      %v234 = vld [vmem:[%s192 + $0x118] sm:$0xff]
      %v235 = vld [vmem:[%s192 + $0x120] sm:$0xff]
      %v236 = vld [vmem:[%s192 + $0x128] sm:$0xff]
      %v237 = vld [vmem:[%s192 + $0x130] sm:$0xff]
      %v238 = vld [vmem:[%s192 + $0x138] sm:$0xff]
      %v239 = vld [vmem:[%s192 + $0x140] sm:$0xff]
      %v240 = vld [vmem:[%s192 + $0x148] sm:$0xff]
      %v241 = vld [vmem:[%s192 + $0x150] sm:$0xff]
      %v242 = vld [vmem:[%s192 + $0x158] sm:$0xff]
      %v243 = vld [vmem:[%s192 + $0x160] sm:$0xff]
      %v244 = vld [vmem:[%s192 + $0x168] sm:$0xff]
      %v245 = vld [vmem:[%s192 + $0x170] sm:$0xff]
      %v246 = vld [vmem:[%s192 + $0x178] sm:$0xff]
      %v247 = vld [vmem:[%s192 + $0x180] sm:$0xff]
      %v248 = vld [vmem:[%s192 + $0x188] sm:$0xff]
      %v249 = vld [vmem:[%s192 + $0x190] sm:$0xff]
      %v250 = vld [vmem:[%s192 + $0x198] sm:$0xff]
      %v251 = vld [vmem:[%s192 + $0x1a0] sm:$0xff]
      %v252 = vld [vmem:[%s192 + $0x1a8] sm:$0xff]
      %v253 = vld [vmem:[%s192 + $0x1b0] sm:$0xff]
      %v254 = vld [vmem:[%s192 + $0x1b8] sm:$0xff]
      %v255 = vld [vmem:[%s192 + $0x1c0] sm:$0xff]
      %v256 = vld [vmem:[%s192 + $0x1c8] sm:$0xff]
      %v257 = vld [vmem:[%s192 + $0x1d0] sm:$0xff]
      %v258 = vld [vmem:[%s192 + $0x1d8] sm:$0xff]
      %v259 = vld [vmem:[%s192 + $0x1e0] sm:$0xff]
      %v260 = vld [vmem:[%s192 + $0x1e8] sm:$0xff]
      %v261 = vld [vmem:[%s192 + $0x1f0] sm:$0xff]
      %v262 = vld [vmem:[%s192 + $0x1f8] sm:$0xff]
      %v263 = vld [vmem:[%s1] sm:$0xf]
      %v328 = vunpack.c.l.b16 %v199
      %v329 = vunpack.c.h.b16 %v199
      %v330 = vunpack.c.l.b16 %v200
      %v331 = vunpack.c.h.b16 %v200
      %v332 = vunpack.c.l.b16 %v201
      %v333 = vunpack.c.h.b16 %v201
      %v334 = vunpack.c.l.b16 %v202
      %v335 = vunpack.c.h.b16 %v202
      %v336 = vunpack.c.l.b16 %v203
      %v337 = vunpack.c.h.b16 %v203
      %v338 = vunpack.c.l.b16 %v204
      %v339 = vunpack.c.h.b16 %v204
      %v340 = vunpack.c.l.b16 %v205
      %v341 = vunpack.c.h.b16 %v205
      %v342 = vunpack.c.l.b16 %v206
      %v343 = vunpack.c.h.b16 %v206
      %v344 = vunpack.c.l.b16 %v207
      %v345 = vunpack.c.h.b16 %v207
      %v346 = vunpack.c.l.b16 %v208
      %v347 = vunpack.c.h.b16 %v208
      %v348 = vunpack.c.l.b16 %v209
      %v349 = vunpack.c.h.b16 %v209
      %v350 = vunpack.c.l.b16 %v210
      %v351 = vunpack.c.h.b16 %v210
      %v352 = vunpack.c.l.b16 %v211
      %v353 = vunpack.c.h.b16 %v211
      %v354 = vunpack.c.l.b16 %v212
      %v355 = vunpack.c.h.b16 %v212
      %v356 = vunpack.c.l.b16 %v213
      %v357 = vunpack.c.h.b16 %v213
      %v358 = vunpack.c.l.b16 %v214
      %v359 = vunpack.c.h.b16 %v214
      %v360 = vunpack.c.l.b16 %v215
      %v361 = vunpack.c.h.b16 %v215
      %v362 = vunpack.c.l.b16 %v216
      %v363 = vunpack.c.h.b16 %v216
      %v364 = vunpack.c.l.b16 %v217
      %v365 = vunpack.c.h.b16 %v217
      %v366 = vunpack.c.l.b16 %v218
      %v367 = vunpack.c.h.b16 %v218
      %v368 = vunpack.c.l.b16 %v219
      %v369 = vunpack.c.h.b16 %v219
      %v370 = vunpack.c.l.b16 %v220
      %v371 = vunpack.c.h.b16 %v220
      %v372 = vunpack.c.l.b16 %v221
      %v373 = vunpack.c.h.b16 %v221
      %v374 = vunpack.c.l.b16 %v222
      %v375 = vunpack.c.h.b16 %v222
      %v376 = vunpack.c.l.b16 %v223
      %v377 = vunpack.c.h.b16 %v223
      %v378 = vunpack.c.l.b16 %v224
      %v379 = vunpack.c.h.b16 %v224
      %v380 = vunpack.c.l.b16 %v225
      %v381 = vunpack.c.h.b16 %v225
      %v382 = vunpack.c.l.b16 %v226
      %v383 = vunpack.c.h.b16 %v226
      %v384 = vunpack.c.l.b16 %v227
      %v385 = vunpack.c.h.b16 %v227
      %v386 = vunpack.c.l.b16 %v228
      %v387 = vunpack.c.h.b16 %v228
      %v388 = vunpack.c.l.b16 %v229
      %v389 = vunpack.c.h.b16 %v229
      %v390 = vunpack.c.l.b16 %v230
      %v391 = vunpack.c.h.b16 %v230
      %v392 = vunpack.c.l.b16 %v231
      %v393 = vunpack.c.h.b16 %v231
      %v394 = vunpack.c.l.b16 %v232
      %v395 = vunpack.c.h.b16 %v232
      %v396 = vunpack.c.l.b16 %v233
      %v397 = vunpack.c.h.b16 %v233
      %v398 = vunpack.c.l.b16 %v234
      %v399 = vunpack.c.h.b16 %v234
      %v400 = vunpack.c.l.b16 %v235
      %v401 = vunpack.c.h.b16 %v235
      %v402 = vunpack.c.l.b16 %v236
      %v403 = vunpack.c.h.b16 %v236
      %v404 = vunpack.c.l.b16 %v237
      %v405 = vunpack.c.h.b16 %v237
      %v406 = vunpack.c.l.b16 %v238
      %v407 = vunpack.c.h.b16 %v238
      %v408 = vunpack.c.l.b16 %v239
      %v409 = vunpack.c.h.b16 %v239
      %v410 = vunpack.c.l.b16 %v240
      %v411 = vunpack.c.h.b16 %v240
      %v412 = vunpack.c.l.b16 %v241
      %v413 = vunpack.c.h.b16 %v241
      %v414 = vunpack.c.l.b16 %v242
      %v415 = vunpack.c.h.b16 %v242
      %v416 = vunpack.c.l.b16 %v243
      %v417 = vunpack.c.h.b16 %v243
      %v418 = vunpack.c.l.b16 %v244
      %v419 = vunpack.c.h.b16 %v244
      %v420 = vunpack.c.l.b16 %v245
      %v421 = vunpack.c.h.b16 %v245
      %v422 = vunpack.c.l.b16 %v246
      %v423 = vunpack.c.h.b16 %v246
      %v424 = vunpack.c.l.b16 %v247
      %v425 = vunpack.c.h.b16 %v247
      %v426 = vunpack.c.l.b16 %v248
      %v427 = vunpack.c.h.b16 %v248
      %v428 = vunpack.c.l.b16 %v249
      %v429 = vunpack.c.h.b16 %v249
      %v430 = vunpack.c.l.b16 %v250
      %v431 = vunpack.c.h.b16 %v250
      %v432 = vunpack.c.l.b16 %v251
      %v433 = vunpack.c.h.b16 %v251
      %v434 = vunpack.c.l.b16 %v252
      %v435 = vunpack.c.h.b16 %v252
      %v436 = vunpack.c.l.b16 %v253
      %v437 = vunpack.c.h.b16 %v253
      %v438 = vunpack.c.l.b16 %v254
      %v439 = vunpack.c.h.b16 %v254
      %v440 = vunpack.c.l.b16 %v255
      %v441 = vunpack.c.h.b16 %v255
      %v442 = vunpack.c.l.b16 %v256
      %v443 = vunpack.c.h.b16 %v256
      %v444 = vunpack.c.l.b16 %v257
      %v445 = vunpack.c.h.b16 %v257
      %v446 = vunpack.c.l.b16 %v258
      %v447 = vunpack.c.h.b16 %v258
      %v448 = vunpack.c.l.b16 %v259
      %v449 = vunpack.c.h.b16 %v259
      %v450 = vunpack.c.l.b16 %v260
      %v451 = vunpack.c.h.b16 %v260
      %v452 = vunpack.c.l.b16 %v261
      %v453 = vunpack.c.h.b16 %v261
      %v454 = vunpack.c.l.b16 %v262
      %v455 = vunpack.c.h.b16 %v262
      %v456 = vpack.c.b16 %v336, %v328
      %v457 = vpack.c.b16 %v337, %v329
      %v458 = vpack.c.b16 %v338, %v330
      %v459 = vpack.c.b16 %v339, %v331
      %v460 = vpack.c.b16 %v340, %v332
      %v461 = vpack.c.b16 %v341, %v333
      %v462 = vpack.c.b16 %v342, %v334
      %v463 = vpack.c.b16 %v343, %v335
      %v464 = vpack.c.b16 %v352, %v344
      %v465 = vpack.c.b16 %v353, %v345
      %v466 = vpack.c.b16 %v354, %v346
      %v467 = vpack.c.b16 %v355, %v347
      %v468 = vpack.c.b16 %v356, %v348
      %v469 = vpack.c.b16 %v357, %v349
      %v470 = vpack.c.b16 %v358, %v350
      %v471 = vpack.c.b16 %v359, %v351
      %v472 = vpack.c.b16 %v368, %v360
      %v473 = vpack.c.b16 %v369, %v361
      %v474 = vpack.c.b16 %v370, %v362
      %v475 = vpack.c.b16 %v371, %v363
      %v476 = vpack.c.b16 %v372, %v364
      %v477 = vpack.c.b16 %v373, %v365
      %v478 = vpack.c.b16 %v374, %v366
      %v479 = vpack.c.b16 %v375, %v367
      %v480 = vpack.c.b16 %v384, %v376
      %v481 = vpack.c.b16 %v385, %v377
      %v482 = vpack.c.b16 %v386, %v378
      %v483 = vpack.c.b16 %v387, %v379
      %v484 = vpack.c.b16 %v388, %v380
      %v485 = vpack.c.b16 %v389, %v381
      %v486 = vpack.c.b16 %v390, %v382
      %v487 = vpack.c.b16 %v391, %v383
      %v488 = vpack.c.b16 %v400, %v392
      %v489 = vpack.c.b16 %v401, %v393
      %v490 = vpack.c.b16 %v402, %v394
      %v491 = vpack.c.b16 %v403, %v395
      %v492 = vpack.c.b16 %v404, %v396
      %v493 = vpack.c.b16 %v405, %v397
      %v494 = vpack.c.b16 %v406, %v398
      %v495 = vpack.c.b16 %v407, %v399
      %v496 = vpack.c.b16 %v416, %v408
      %v497 = vpack.c.b16 %v417, %v409
      %v498 = vpack.c.b16 %v418, %v410
      %v499 = vpack.c.b16 %v419, %v411
      %v500 = vpack.c.b16 %v420, %v412
      %v501 = vpack.c.b16 %v421, %v413
      %v502 = vpack.c.b16 %v422, %v414
      %v503 = vpack.c.b16 %v423, %v415
      %v504 = vpack.c.b16 %v432, %v424
      %v505 = vpack.c.b16 %v433, %v425
      %v506 = vpack.c.b16 %v434, %v426
      %v507 = vpack.c.b16 %v435, %v427
      %v508 = vpack.c.b16 %v436, %v428
      %v509 = vpack.c.b16 %v437, %v429
      %v510 = vpack.c.b16 %v438, %v430
      %v511 = vpack.c.b16 %v439, %v431
      %v512 = vpack.c.b16 %v448, %v440
      %v513 = vpack.c.b16 %v449, %v441
      %v514 = vpack.c.b16 %v450, %v442
      %v515 = vpack.c.b16 %v451, %v443
      %v516 = vpack.c.b16 %v452, %v444
      %v517 = vpack.c.b16 %v453, %v445
      %v518 = vpack.c.b16 %v454, %v446
      %v519 = vpack.c.b16 %v455, %v447
      %584 = vmatprep.subr.bf16.mxu0 %v513
      %585 = vmatpush1.bf16.msra.mxu0 %v512
      %586 = vmatprep.subr.bf16.mxu0 %v505
      %587 = vmatpush1.bf16.msra.mxu0 %v504
      %588 = vmatprep.subr.bf16.mxu0 %v497
      %589 = vmatpush1.bf16.msra.mxu0 %v496
      %590 = vmatprep.subr.bf16.mxu0 %v489
      %591 = vmatpush1.bf16.msra.mxu0 %v488
      %592 = vmatprep.subr.bf16.mxu0 %v481
      %593 = vmatpush1.bf16.msra.mxu0 %v480
      %594 = vmatprep.subr.bf16.mxu0 %v473
      %595 = vmatpush1.bf16.msra.mxu0 %v472
      %596 = vmatprep.subr.bf16.mxu0 %v465
      %597 = vmatpush1.bf16.msra.mxu0 %v464
      %598 = vmatprep.subr.bf16.mxu0 %v457
      %599 = vmatpush1.bf16.msra.mxu0 %v456
      %600 = vmatprep.subr.bf16.mxu0 0
      %601 = vmatpush2.bf16.msra.mxu0 0
      %602 = vmatprep.subr.bf16.mxu0 0
      %603 = vmatpush2.bf16.msra.mxu0 0
      %604 = vmatprep.subr.bf16.mxu0 0
      %605 = vmatpush2.bf16.msra.mxu0 0
      %606 = vmatprep.subr.bf16.mxu0 0
      %607 = vmatpush2.bf16.msra.mxu0 0
      %608 = vmatprep.subr.bf16.mxu0 0
      %609 = vmatpush2.bf16.msra.mxu0 0
      %610 = vmatprep.subr.bf16.mxu0 0
      %611 = vmatpush2.bf16.msra.mxu0 0
      %612 = vmatprep.subr.bf16.mxu0 0
      %613 = vmatpush2.bf16.msra.mxu0 0
      %614 = vmatprep.subr.bf16.mxu0 0
      %615 = vmatpush2.bf16.msra.mxu0 0
      %616 = vmatprep.mubr.bf16.mxu0 0
      %617 = vmatmul.mubr.bf16.gmra.mxu0 %v263
      %v618 = vpop.f32.mrf.mxu0
      %v619 = vadd.f32 0.0, %v618
      %v620 = vpop.f32.mrf.mxu0
      %v621 = vadd.f32 0.0, %v620
      %v622 = vpop.f32.mrf.mxu0
      %v623 = vpop.f32.mrf.mxu0
      %624 = vdwg.mxu0
      %625 = vmatprep.subr.bf16.mxu0 %v515
      %626 = vmatpush1.bf16.msra.mxu0 %v514
      %627 = vmatprep.subr.bf16.mxu0 %v507
      %628 = vmatpush1.bf16.msra.mxu0 %v506
      %629 = vmatprep.subr.bf16.mxu0 %v499
      %630 = vmatpush1.bf16.msra.mxu0 %v498
      %631 = vmatprep.subr.bf16.mxu0 %v491
      %632 = vmatpush1.bf16.msra.mxu0 %v490
      %633 = vmatprep.subr.bf16.mxu0 %v483
      %634 = vmatpush1.bf16.msra.mxu0 %v482
      %635 = vmatprep.subr.bf16.mxu0 %v475
      %636 = vmatpush1.bf16.msra.mxu0 %v474
      %637 = vmatprep.subr.bf16.mxu0 %v467
      %638 = vmatpush1.bf16.msra.mxu0 %v466
      %639 = vmatprep.subr.bf16.mxu0 %v459
      %640 = vmatpush1.bf16.msra.mxu0 %v458
      %641 = vmatprep.subr.bf16.mxu0 0
      %642 = vmatpush2.bf16.msra.mxu0 0
      %643 = vmatprep.subr.bf16.mxu0 0
      %644 = vmatpush2.bf16.msra.mxu0 0
      %645 = vmatprep.subr.bf16.mxu0 0
      %646 = vmatpush2.bf16.msra.mxu0 0
      %647 = vmatprep.subr.bf16.mxu0 0
      %648 = vmatpush2.bf16.msra.mxu0 0
      %649 = vmatprep.subr.bf16.mxu0 0
      %650 = vmatpush2.bf16.msra.mxu0 0
      %651 = vmatprep.subr.bf16.mxu0 0
      %652 = vmatpush2.bf16.msra.mxu0 0
      %653 = vmatprep.subr.bf16.mxu0 0
      %654 = vmatpush2.bf16.msra.mxu0 0
      %655 = vmatprep.subr.bf16.mxu0 0
      %656 = vmatpush2.bf16.msra.mxu0 0
      %657 = vmatprep.mubr.bf16.mxu0 0
      %658 = vmatmul.mubr.bf16.gmra.mxu0 %v263
      %v659 = vpop.f32.mrf.mxu0
      %v660 = vadd.f32 0.0, %v659
      %v661 = vpop.f32.mrf.mxu0
      %v662 = vadd.f32 0.0, %v661
      %v663 = vpop.f32.mrf.mxu0
      %v664 = vpop.f32.mrf.mxu0
      %665 = vdwg.mxu0
      %666 = vmatprep.subr.bf16.mxu0 %v517
      %667 = vmatpush1.bf16.msra.mxu0 %v516
      %668 = vmatprep.subr.bf16.mxu0 %v509
      %669 = vmatpush1.bf16.msra.mxu0 %v508
      %670 = vmatprep.subr.bf16.mxu0 %v501
      %671 = vmatpush1.bf16.msra.mxu0 %v500
      %672 = vmatprep.subr.bf16.mxu0 %v493
      %673 = vmatpush1.bf16.msra.mxu0 %v492
      %674 = vmatprep.subr.bf16.mxu0 %v485
      %675 = vmatpush1.bf16.msra.mxu0 %v484
      %676 = vmatprep.subr.bf16.mxu0 %v477
      %677 = vmatpush1.bf16.msra.mxu0 %v476
      %678 = vmatprep.subr.bf16.mxu0 %v469
      %679 = vmatpush1.bf16.msra.mxu0 %v468
      %680 = vmatprep.subr.bf16.mxu0 %v461
      %681 = vmatpush1.bf16.msra.mxu0 %v460
      %682 = vmatprep.subr.bf16.mxu0 0
      %683 = vmatpush2.bf16.msra.mxu0 0
      %684 = vmatprep.subr.bf16.mxu0 0
      %685 = vmatpush2.bf16.msra.mxu0 0
      %686 = vmatprep.subr.bf16.mxu0 0
      %687 = vmatpush2.bf16.msra.mxu0 0
      %688 = vmatprep.subr.bf16.mxu0 0
      %689 = vmatpush2.bf16.msra.mxu0 0
      %690 = vmatprep.subr.bf16.mxu0 0
      %691 = vmatpush2.bf16.msra.mxu0 0
      %692 = vmatprep.subr.bf16.mxu0 0
      %693 = vmatpush2.bf16.msra.mxu0 0
      %694 = vmatprep.subr.bf16.mxu0 0
      %695 = vmatpush2.bf16.msra.mxu0 0
      %696 = vmatprep.subr.bf16.mxu0 0
      %697 = vmatpush2.bf16.msra.mxu0 0
      %698 = vmatprep.mubr.bf16.mxu0 0
      %699 = vmatmul.mubr.bf16.gmra.mxu0 %v263
      %v700 = vpop.f32.mrf.mxu0
      %v701 = vadd.f32 0.0, %v700
      %v702 = vpop.f32.mrf.mxu0
      %v703 = vadd.f32 0.0, %v702
      %v704 = vpop.f32.mrf.mxu0
      %v705 = vpop.f32.mrf.mxu0
      %706 = vdwg.mxu0
      %707 = vmatprep.subr.bf16.mxu0 %v519
      %708 = vmatpush1.bf16.msra.mxu0 %v518
      %709 = vmatprep.subr.bf16.mxu0 %v511
      %710 = vmatpush1.bf16.msra.mxu0 %v510
      %711 = vmatprep.subr.bf16.mxu0 %v503
      %712 = vmatpush1.bf16.msra.mxu0 %v502
      %713 = vmatprep.subr.bf16.mxu0 %v495
      %714 = vmatpush1.bf16.msra.mxu0 %v494
      %715 = vmatprep.subr.bf16.mxu0 %v487
      %716 = vmatpush1.bf16.msra.mxu0 %v486
      %717 = vmatprep.subr.bf16.mxu0 %v479
      %718 = vmatpush1.bf16.msra.mxu0 %v478
      %719 = vmatprep.subr.bf16.mxu0 %v471
      %720 = vmatpush1.bf16.msra.mxu0 %v470
      %721 = vmatprep.subr.bf16.mxu0 %v463
      %722 = vmatpush1.bf16.msra.mxu0 %v462
      %723 = vmatprep.subr.bf16.mxu0 0
      %724 = vmatpush2.bf16.msra.mxu0 0
      %725 = vmatprep.subr.bf16.mxu0 0
      %726 = vmatpush2.bf16.msra.mxu0 0
      %727 = vmatprep.subr.bf16.mxu0 0
      %728 = vmatpush2.bf16.msra.mxu0 0
      %729 = vmatprep.subr.bf16.mxu0 0
      %730 = vmatpush2.bf16.msra.mxu0 0
      %731 = vmatprep.subr.bf16.mxu0 0
      %732 = vmatpush2.bf16.msra.mxu0 0
      %733 = vmatprep.subr.bf16.mxu0 0
      %734 = vmatpush2.bf16.msra.mxu0 0
      %735 = vmatprep.subr.bf16.mxu0 0
      %736 = vmatpush2.bf16.msra.mxu0 0
      %737 = vmatprep.subr.bf16.mxu0 0
      %738 = vmatpush2.bf16.msra.mxu0 0
      %739 = vmatprep.mubr.bf16.mxu0 0
      %740 = vmatmul.mubr.bf16.gmra.mxu0 %v263
      %v741 = vpop.f32.mrf.mxu0
      %v742 = vadd.f32 0.0, %v741
      %v743 = vpop.f32.mrf.mxu0
      %v744 = vadd.f32 0.0, %v743
      %v745 = vpop.f32.mrf.mxu0
      %v746 = vpop.f32.mrf.mxu0
      %747 = vdwg.mxu0
      %v748 = vadd.f32 %v619, %v621
      %v749 = vadd.f32 %v748, %v660
      %v750 = vadd.f32 %v749, %v662
      %v751 = vadd.f32 %v750, %v701
      %v752 = vadd.f32 %v751, %v703
      %v753 = vadd.f32 %v752, %v742
      %v754 = vadd.f32 %v753, %v744
      %755 = vadd.xlane.f32.xlu0 %v754
      %v756 = vpop.xlane.xlu0 %755
      %v757 = vmul.f32 %v756, 0.0009765625
      %v758 = vmul.f32 %v619, %v619
      %v759 = vmul.f32 %v621, %v621
      %v760 = vmul.f32 %v660, %v660
      %v761 = vmul.f32 %v662, %v662
      %v762 = vmul.f32 %v701, %v701
      %v763 = vmul.f32 %v703, %v703
      %v764 = vmul.f32 %v742, %v742
      %v765 = vmul.f32 %v744, %v744
      %v766 = vadd.f32 %v758, %v759
      %v767 = vadd.f32 %v766, %v760
      %v768 = vadd.f32 %v767, %v761
      %v769 = vadd.f32 %v768, %v762
      %v770 = vadd.f32 %v769, %v763
      %v771 = vadd.f32 %v770, %v764
      %v772 = vadd.f32 %v771, %v765
      %773 = vadd.xlane.f32.xlu0 %v772
      %v774 = vpop.xlane.xlu0 %773
      %v775 = vmul.f32 %v774, 0.0009765625
      %v776 = vmul.f32 %v757, %v757
      %v777 = vsub.f32 %v775, %v776
      %v778 = vmax.f32 %v777, 0.0
      %v779 = vld [vmem:[%s2] sm:$0xff]
      %v780 = vmul.f32 %v779, 0.25
      %v781 = vadd.f32 %v778, 1e-05
      %v782 = vrsqrt.pop %v781
      %v783 = vmul.f32 %v780, %v782
      %v784 = vld [vmem:[%s3] sm:$0xff]
      %v785 = vmul.f32 %v784, 0.25
      %v786 = vmul.f32 %v757, %v783
      %v787 = vsub.f32 %v785, %v786
      %789 = vset.pattern.permute.xlu0 0
      %790 = vperm.xlu0 %789, %v783
      %v791 = vpop.permute.xlu0 %790
      %v793 = vmul.f32 %v619, %v791
      %v794 = vmul.f32 %v621, %v791
      %v795 = vmul.f32 %v660, %v791
      %v796 = vmul.f32 %v662, %v791
      %v797 = vmul.f32 %v701, %v791
      %v798 = vmul.f32 %v703, %v791
      %v799 = vmul.f32 %v742, %v791
      %v800 = vmul.f32 %v744, %v791
      %802 = vset.pattern.permute.xlu0 0
      %803 = vperm.xlu0 %802, %v787
      %v804 = vpop.permute.xlu0 %803
      %v806 = vadd.f32 %v793, %v804
      %v807 = vadd.f32 %v794, %v804
      %v808 = vadd.f32 %v795, %v804
      %v809 = vadd.f32 %v796, %v804
      %v810 = vadd.f32 %v797, %v804
      %v811 = vadd.f32 %v798, %v804
      %v812 = vadd.f32 %v799, %v804
      %v813 = vadd.f32 %v800, %v804
      %v814 = vmax.f32 %v806, 0.0
      %v815 = vmax.f32 %v807, 0.0
      %v816 = vmax.f32 %v808, 0.0
      %v817 = vmax.f32 %v809, 0.0
      %v818 = vmax.f32 %v810, 0.0
      %v819 = vmax.f32 %v811, 0.0
      %v820 = vmax.f32 %v812, 0.0
      %v821 = vmax.f32 %v813, 0.0
      %v822 = vadd.f32 %v814, %v816
      %v823 = vadd.f32 %v815, %v817
      %v824 = vadd.f32 %v822, %v818
      %v825 = vadd.f32 %v823, %v819
      %v826 = vadd.f32 %v824, %v820
      %v827 = vadd.f32 %v825, %v821
      %828 = vst [vmem:[%s197] sm:$0xff] %v826
      %829 = vst [vmem:[%s197 + $0x8] sm:$0xff] %v827
      %p830 = scmp.lt.s32.totalorder %s15, 1
      %s831 = scalar_select %p830, %s15, 1
      %s832 = smul.addr %s831, 2
      %s833 = smul.addr %s832, 8
      %s834 = scalar_lea.vmem %s4, %s833
      // Predicated region
      $region37: #{downblock3d_pallas.1} parent=35 // pred_check
        %p835 = pneg %p122
      $region38: #{downblock3d_pallas.1} parent=35 // pred_check_branch
        %837 = sbr.rel (%p835) target = $region40
      $region39: #{downblock3d_pallas.1} parent=35 // pred_region
        _
      $region40: #{downblock3d_pallas.1} parent=35 // pred_fallthru
        _
    $region36: #{downblock3d_pallas.1} parent=5 // pred_fallthru
      _
    %p838 = scmp.le.s32.totalorder 2, %s10
    // Predicated region
    $region41: #{downblock3d_pallas.1} parent=5 // pred_check
      %p839 = pneg %p838
    $region42: #{downblock3d_pallas.1} parent=5 // pred_check_branch
      %841 = sbr.rel (%p839) target = $region44
    $region43: #{downblock3d_pallas.1} parent=5 // pred_region
      %s842 = ssub.s32 %s10, 2
      // Predicated region
      $region45: #{downblock3d_pallas.1} parent=43 // pred_check
        %p843 = pneg %p128
      $region46: #{downblock3d_pallas.1} parent=43 // pred_check_branch
        %845 = sbr.rel (%p843) target = $region48
      $region47: #{downblock3d_pallas.1} parent=43 // pred_region
        %p846 = scmp.lt.s32.totalorder %s16, 1
        %s847 = scalar_select %p846, %s16, 1
        %s848 = smul.addr %s847, 2
        %s849 = smul.addr %s848, 8
        %s850 = scalar_lea.vmem %s4, %s849
      $region48: #{downblock3d_pallas.1} parent=43 // pred_fallthru
        _
    $region44: #{downblock3d_pallas.1} parent=5 // pred_fallthru
      _
  $region6: #{downblock3d_pallas.1} parent=0 // loop_footer
    %s14 = sadd.s32 1, %s10
  $region7: #{downblock3d_pallas.1} parent=0 // loop_footer_branch
    %9 = sbr.rel target = $region3
  $region8: #{downblock3d_pallas.1} parent=0 // loop_exit
    _

</llo_original>
